<compile_context>
chip_gen: v7x
topology: tpu7x:2x2x1
jax: 0.10.0
libtpu: 0.0.40
codegen_flags: <defaults>
</compile_context>

<pallas_src>
import math
from typing import NamedTuple

import jax
import jax.numpy as jnp
from jax.experimental import pallas as pl
from jax.experimental.pallas import tpu as pltpu


# ----------------------------------------------------------------------------
# Helpers
# ----------------------------------------------------------------------------

def _round_up(x, m):
    return ((x + m - 1) // m) * m


def _erf_f32(x):
    # Abramowitz & Stegun 7.1.26 rational approximation, |error| <= 1.5e-7.
    # Uses only mul/add/div/exp/where -> VPU + EUP, guaranteed Mosaic lowering.
    a1, a2, a3, a4, a5 = (0.254829592, -0.284496736, 1.421413741,
                          -1.453152027, 1.061405429)
    p = 0.3275911
    ax = jnp.abs(x)
    t = 1.0 / (1.0 + p * ax)
    poly = ((((a5 * t + a4) * t + a3) * t + a2) * t + a1) * t
    y = 1.0 - poly * jnp.exp(-ax * ax)
    return jnp.where(x < 0, -y, y)


def _gelu_erf_f32(x):
    # Exact (erf-based) GELU, matching PyTorch nn.GELU() default.
    return 0.5 * x * (1.0 + _erf_f32(x * (1.0 / math.sqrt(2.0))))


def _vmem_capacity_bytes():
    """Best-effort query of per-core VMEM capacity; conservative fallback."""
    try:
        info = pltpu.get_tpu_info()
        for name in ("vmem_capacity_bytes", "vmem_size_bytes", "vmem_bytes"):
            v = getattr(info, name, None)
            if v:
                return int(v)
    except Exception:
        pass
    return 64 * 1024 * 1024  # v7x per-TC capacity (most conservative)


# ----------------------------------------------------------------------------
# One-time parameter preparation (transpose + cast + pad) — call at load time.
# ----------------------------------------------------------------------------

class MlpParams(NamedTuple):
    w1_t: jax.Array   # (C_pad, H_pad), compute dtype   (fc1.weight^T, padded)
    b1: jax.Array     # (1, H_pad), fp32
    w2_t: jax.Array   # (H_pad, O_pad), compute dtype   (fc2.weight^T, padded)
    b2: jax.Array     # (1, O_pad), fp32
    in_features: int
    hidden_features: int
    out_features: int


def prepare_mlp_params(w1, b1, w2, b2, *, compute_dtype=jnp.bfloat16):
    """Transpose/cast/pad PyTorch-layout weights ONCE; reuse across forwards.

    w1: (hidden_features, in_features)   fc1.weight
    b1: (hidden_features,)               fc1.bias
    w2: (out_features, hidden_features)  fc2.weight
    b2: (out_features,)                  fc2.bias
    """
    hidden_features, in_features = w1.shape
    out_features, hid_f = w2.shape
    assert hid_f == hidden_features

    C_pad = _round_up(in_features, 128)
    H_pad = _round_up(hidden_features, 128)
    O_pad = _round_up(out_features, 128)

    w1_t = jnp.transpose(w1).astype(compute_dtype)          # (C, H)
    w2_t = jnp.transpose(w2).astype(compute_dtype)          # (H, O)
    w1_t = jnp.pad(w1_t, ((0, C_pad - in_features), (0, H_pad - hidden_features)))
    w2_t = jnp.pad(w2_t, ((0, H_pad - hidden_features), (0, O_pad - out_features)))
    b1_p = jnp.pad(b1.astype(jnp.float32), (0, H_pad - hidden_features)).reshape(1, H_pad)
    b2_p = jnp.pad(b2.astype(jnp.float32), (0, O_pad - out_features)).reshape(1, O_pad)

    return MlpParams(w1_t, b1_p, w2_t, b2_p,
                     in_features, hidden_features, out_features)


# ----------------------------------------------------------------------------
# Kernel
# ----------------------------------------------------------------------------

def mlp_kernel(x_ref, w1_ref, b1_ref, w2_ref, b2_ref, out_ref, acc_ref):
    # Grid: (row tiles ["parallel"], hidden chunks ["arbitrary"]).
    # x_ref:  (tm, C_pad)  compute dtype (block index constant along H -> stays resident)
    # w1_ref: (C_pad, th)  compute dtype
    # b1_ref: (1, th)      fp32
    # w2_ref: (th, O_pad)  compute dtype
    # b2_ref: (1, O_pad)   fp32
    # acc_ref:(tm, O_pad)  fp32 VMEM scratch accumulator
    h_idx = pl.program_id(1)

    @pl.when(h_idx == 0)
    def _init():
        acc_ref[...] = jnp.zeros_like(acc_ref)

    # fc1 chunk: MXU matmul with fp32 accumulation; bias + GELU in fp32.
    h = jnp.dot(x_ref[...], w1_ref[...], preferred_element_type=jnp.float32)
    h = h + b1_ref[...]
    h = _gelu_erf_f32(h)

    # fc2 chunk: partial accumulate into the fp32 scratch.
    acc_ref[...] += jnp.dot(h.astype(w2_ref.dtype), w2_ref[...],
                            preferred_element_type=jnp.float32)

    @pl.when(h_idx == pl.num_programs(1) - 1)
    def _finalize():
        out_ref[...] = (acc_ref[...] + b2_ref[...]).astype(out_ref.dtype)


# ----------------------------------------------------------------------------
# Wrapper
# ----------------------------------------------------------------------------

def mlp_forward(x, params: MlpParams, *, block_rows=None):
    """Fused Mlp forward: y = fc2(GELU(fc1(x))).  x: (..., in_features)."""
    orig_shape = x.shape
    C, H, O = params.in_features, params.hidden_features, params.out_features
    assert orig_shape[-1] == C
    C_pad, H_pad = params.w1_t.shape
    O_pad = params.w2_t.shape[1]
    compute_dtype = params.w1_t.dtype

    M = int(math.prod(orig_shape[:-1])) if len(orig_shape) > 1 else 1
    x2 = x.reshape(M, C).astype(compute_dtype)

    # Generation-aware tile / VMEM-limit selection.
    vmem_cap = _vmem_capacity_bytes()
    if vmem_cap >= 96 * 1024 * 1024:          # v5e / v6e (128 MiB VMEM)
        vmem_limit = 100 * 1024 * 1024
        row_cap = 512
    else:                                      # v7x (64 MiB per TC)
        vmem_limit = 48 * 1024 * 1024
        row_cap = 256

    if block_rows is None:
        block_rows = min(row_cap, _round_up(M, 128))
    M_pad = _round_up(M, block_rows)

    # Hidden-chunk width: largest of {512, 256, 128} that divides H_pad.
    th = next(c for c in (512, 256, 128) if H_pad % c == 0)

    # Zero-pad rows / input features (padded columns contribute 0 via zero weights).
    if M_pad != M or C_pad != C:
        x2 = jnp.pad(x2, ((0, M_pad - M), (0, C_pad - C)))

    grid = (M_pad // block_rows, H_pad // th)

    cost = pl.CostEstimate(
        flops=int(2 * M_pad * (C_pad * H_pad + H_pad * O_pad)),
        transcendentals=int(M_pad * H_pad),
        bytes_accessed=int(x2.size * x2.dtype.itemsize
                           + params.w1_t.size * params.w1_t.dtype.itemsize
                           + params.w2_t.size * params.w2_t.dtype.itemsize
                           + params.b1.size * 4 + params.b2.size * 4
                           + M_pad * O_pad * jnp.dtype(x.dtype).itemsize),
    )

    out2 = pl.pallas_call(
        mlp_kernel,
        out_shape=jax.ShapeDtypeStruct((M_pad, O_pad), x.dtype),
        grid=grid,
        in_specs=[
            pl.BlockSpec((block_rows, C_pad), lambda i, h: (i, 0)),
            pl.BlockSpec((C_pad, th), lambda i, h: (0, h)),
            pl.BlockSpec((1, th), lambda i, h: (0, h)),
            pl.BlockSpec((th, O_pad), lambda i, h: (h, 0)),
            pl.BlockSpec((1, O_pad), lambda i, h: (0, 0)),
        ],
        out_specs=pl.BlockSpec((block_rows, O_pad), lambda i, h: (i, 0)),
        scratch_shapes=[pltpu.VMEM((block_rows, O_pad), jnp.float32)],
        compiler_params=pltpu.CompilerParams(
            dimension_semantics=("parallel", "arbitrary"),
            vmem_limit_bytes=vmem_limit,
        ),
        cost_estimate=cost,
    )(x2, params.w1_t, params.b1, params.w2_t, params.b2)

    out = out2[:M, :O]
    return out.reshape(*orig_shape[:-1], O)


def mlp_reference(x, w1, b1, w2, b2):
    """Pure-JAX reference mirroring the PyTorch forward (eval mode, drop=0),
    using the exact (erf) GELU that nn.GELU() defaults to."""
    h = jnp.einsum('...c,hc->...h', x, w1) + b1
    h = jax.nn.gelu(h, approximate=False)
    return jnp.einsum('...h,oh->...o', h, w2) + b2


# ----------------------------------------------------------------------------
# Self-test
# ----------------------------------------------------------------------------

if __name__ == "__main__":
    B, N = 2, 16
    in_features, hidden_features, out_features = 32, 64, 32

    key = jax.random.PRNGKey(0)
    kx, k1, kb1, k2, kb2 = jax.random.split(key, 5)
    x = jax.random.normal(kx, (B, N, in_features), dtype=jnp.float32)
    w1 = jax.random.normal(k1, (hidden_features, in_features), dtype=jnp.float32) * 0.05
    b1 = jax.random.normal(kb1, (hidden_features,), dtype=jnp.float32) * 0.05
    w2 = jax.random.normal(k2, (out_features, hidden_features), dtype=jnp.float32) * 0.05
    b2 = jax.random.normal(kb2, (out_features,), dtype=jnp.float32) * 0.05

    ref = mlp_reference(x, w1, b1, w2, b2)

    # fp32 operand path (tight check vs the exact-GELU reference).
    params_f32 = prepare_mlp_params(w1, b1, w2, b2, compute_dtype=jnp.float32)
    out_f32 = jax.block_until_ready(mlp_forward(x, params_f32))
    assert out_f32.shape == (B, N, out_features)
    assert jnp.allclose(out_f32, ref, atol=1e-4, rtol=1e-4), "fp32 mismatch vs reference"

    # Default bf16 MXU-operand path with fp32 accumulation (perf path; looser check).
    params_bf16 = prepare_mlp_params(w1, b1, w2, b2)   # compute_dtype=bfloat16
    out_bf16 = jax.block_until_ready(mlp_forward(x, params_bf16))
    assert out_bf16.shape == (B, N, out_features)
    assert jnp.allclose(out_bf16, ref, atol=5e-2, rtol=5e-2), "bf16 mismatch vs reference"

    # TODO(synk): training-mode Dropout (drop > 0) is not implemented; the PyTorch
    # module is identity there in eval mode, which is what this kernel matches.
    # TODO(synk): optional fp8 weight residency on v7x is not implemented (needs
    # per-channel scaling / validation); bf16 is the default perf path.
    print("KERNEL_OK")
</pallas_src>

<mosaic_0001>
module attributes {stable_mosaic.version = 11 : i64} {
  func.func @mlp_kernel(%arg0: i32, %arg1: i32, %arg2: memref<128x128xf32, #tpu.memory_space<vmem>>, %arg3: memref<128x128xf32, #tpu.memory_space<vmem>>, %arg4: memref<1x128xf32, #tpu.memory_space<vmem>>, %arg5: memref<128x128xf32, #tpu.memory_space<vmem>>, %arg6: memref<1x128xf32, #tpu.memory_space<vmem>>, %arg7: memref<128x128xf32, #tpu.memory_space<vmem>>, %arg8: memref<128x128xf32, #tpu.memory_space<vmem>>) attributes {dimension_semantics = [#tpu.dimension_semantics<parallel>, #tpu.dimension_semantics<arbitrary>], iteration_bounds = array<i64: 1, 1>, scalar_prefetch = 0 : i64, scratch_operands = 1 : i64, tpu.core_type = #tpu.core_type<tc>, window_params = [{transform_indices = @transform_0, window_bounds = array<i64: 128, 128>}, {transform_indices = @transform_1, window_bounds = array<i64: 128, 128>}, {transform_indices = @transform_2, window_bounds = array<i64: 1, 128>}, {transform_indices = @transform_3, window_bounds = array<i64: 128, 128>}, {pipeline_mode = #tpu.pipeline_mode<synchronous>, transform_indices = @transform_4, window_bounds = array<i64: 1, 128>}, {transform_indices = @transform_5, window_bounds = array<i64: 128, 128>}]} {
    %c0_i32 = arith.constant 0 : i32
    %0 = arith.cmpi eq, %arg1, %c0_i32 : i32
    %1 = arith.extui %0 : i1 to i32
    %c0_i32_0 = arith.constant 0 : i32
    %2 = arith.cmpi ne, %1, %c0_i32_0 : i32
    scf.if %2 {
      %cst_30 = arith.constant 0.000000e+00 : f32
      %57 = vector.broadcast %cst_30 : f32 to vector<128x128xf32>
      %c0_31 = arith.constant 0 : index
      %c0_32 = arith.constant 0 : index
      %58 = vector.load %arg8[%c0_31, %c0_32] : memref<128x128xf32, #tpu.memory_space<vmem>>, vector<128x128xf32>
      tpu.vector_store %arg8[%c0_31, %c0_32], %57 {strides = array<i32>} : memref<128x128xf32, #tpu.memory_space<vmem>>, vector<128x128xf32>,
    } else {
    }
    %c0 = arith.constant 0 : index
    %c0_1 = arith.constant 0 : index
    %3 = vector.load %arg2[%c0, %c0_1] : memref<128x128xf32, #tpu.memory_space<vmem>>, vector<128x128xf32>
    %c0_2 = arith.constant 0 : index
    %c0_3 = arith.constant 0 : index
    %4 = vector.load %arg3[%c0_2, %c0_3] : memref<128x128xf32, #tpu.memory_space<vmem>>, vector<128x128xf32>
    %cst = arith.constant dense<0.000000e+00> : vector<128x128xf32>
    %5 = tpu.matmul %3, %4, %cst {dimension_numbers = #tpu.dot_dimension_numbers<[1], [0], [0], [1], [0, 0, 1, 1], [], []>} : vector<128x128xf32>, vector<128x128xf32>, vector<128x128xf32> -> vector<128x128xf32>
    %c0_4 = arith.constant 0 : index
    %c0_5 = arith.constant 0 : index
    %6 = vector.load %arg4[%c0_4, %c0_5] : memref<1x128xf32, #tpu.memory_space<vmem>>, vector<1x128xf32>
    %7 = vector.broadcast %6 : vector<1x128xf32> to vector<128x128xf32>
    %8 = arith.addf %5, %7 : vector<128x128xf32>
    %cst_6 = arith.constant 5.000000e-01 : f32
    %9 = vector.broadcast %cst_6 : f32 to vector<128x128xf32>
    %10 = arith.mulf %9, %8 : vector<128x128xf32>
    %cst_7 = arith.constant 0.707106769 : f32
    %11 = vector.broadcast %cst_7 : f32 to vector<128x128xf32>
    %12 = arith.mulf %8, %11 : vector<128x128xf32>
    %13 = math.absf %12 : vector<128x128xf32>
    %cst_8 = arith.constant 0.327591091 : f32
    %14 = vector.broadcast %cst_8 : f32 to vector<128x128xf32>
    %15 = arith.mulf %14, %13 : vector<128x128xf32>
    %cst_9 = arith.constant 1.000000e+00 : f32
    %16 = vector.broadcast %cst_9 : f32 to vector<128x128xf32>
    %17 = arith.addf %16, %15 : vector<128x128xf32>
    %cst_10 = arith.constant 1.000000e+00 : f32
    %18 = vector.broadcast %cst_10 : f32 to vector<128x128xf32>
    %19 = arith.divf %18, %17 : vector<128x128xf32>
    %cst_11 = arith.constant 1.06140542 : f32
    %20 = vector.broadcast %cst_11 : f32 to vector<128x128xf32>
    %21 = arith.mulf %20, %19 : vector<128x128xf32>
    %cst_12 = arith.constant -1.45315206 : f32
    %22 = vector.broadcast %cst_12 : f32 to vector<128x128xf32>
    %23 = arith.addf %21, %22 : vector<128x128xf32>
    %24 = arith.mulf %23, %19 : vector<128x128xf32>
    %cst_13 = arith.constant 1.42141378 : f32
    %25 = vector.broadcast %cst_13 : f32 to vector<128x128xf32>
    %26 = arith.addf %24, %25 : vector<128x128xf32>
    %27 = arith.mulf %26, %19 : vector<128x128xf32>
    %cst_14 = arith.constant -0.284496725 : f32
    %28 = vector.broadcast %cst_14 : f32 to vector<128x128xf32>
    %29 = arith.addf %27, %28 : vector<128x128xf32>
    %30 = arith.mulf %29, %19 : vector<128x128xf32>
    %cst_15 = arith.constant 0.254829586 : f32
    %31 = vector.broadcast %cst_15 : f32 to vector<128x128xf32>
    %32 = arith.addf %30, %31 : vector<128x128xf32>
    %33 = arith.mulf %32, %19 : vector<128x128xf32>
    %cst_16 = arith.constant 0.000000e+00 : f32
    %34 = vector.broadcast %cst_16 : f32 to vector<128x128xf32>
    %35 = arith.subf %34, %13 : vector<128x128xf32>
    %36 = arith.mulf %35, %13 : vector<128x128xf32>
    %37 = math.exp %36 : vector<128x128xf32>
    %38 = arith.mulf %33, %37 : vector<128x128xf32>
    %cst_17 = arith.constant 1.000000e+00 : f32
    %39 = vector.broadcast %cst_17 : f32 to vector<128x128xf32>
    %40 = arith.subf %39, %38 : vector<128x128xf32>
    %cst_18 = arith.constant 0.000000e+00 : f32
    %41 = vector.broadcast %cst_18 : f32 to vector<128x128xf32>
    %42 = arith.cmpf olt, %12, %41 : vector<128x128xf32>
    %cst_19 = arith.constant 0.000000e+00 : f32
    %43 = vector.broadcast %cst_19 : f32 to vector<128x128xf32>
    %44 = arith.subf %43, %40 : vector<128x128xf32>
    %45 = arith.select %42, %44, %40 : vector<128x128xi1>, vector<128x128xf32>
    %cst_20 = arith.constant 1.000000e+00 : f32
    %46 = vector.broadcast %cst_20 : f32 to vector<128x128xf32>
    %47 = arith.addf %46, %45 : vector<128x128xf32>
    %48 = arith.mulf %10, %47 : vector<128x128xf32>
    %c0_21 = arith.constant 0 : index
    %c0_22 = arith.constant 0 : index
    %49 = vector.load %arg8[%c0_21, %c0_22] : memref<128x128xf32, #tpu.memory_space<vmem>>, vector<128x128xf32>
    %c0_23 = arith.constant 0 : index
    %c0_24 = arith.constant 0 : index
    %50 = vector.load %arg5[%c0_23, %c0_24] : memref<128x128xf32, #tpu.memory_space<vmem>>, vector<128x128xf32>
    %cst_25 = arith.constant dense<0.000000e+00> : vector<128x128xf32>
    %51 = tpu.matmul %48, %50, %cst_25 {dimension_numbers = #tpu.dot_dimension_numbers<[1], [0], [0], [1], [0, 0, 1, 1], [], []>} : vector<128x128xf32>, vector<128x128xf32>, vector<128x128xf32> -> vector<128x128xf32>
    %52 = arith.addf %49, %51 : vector<128x128xf32>
    %c0_26 = arith.constant 0 : index
    %c0_27 = arith.constant 0 : index
    %53 = vector.load %arg8[%c0_26, %c0_27] : memref<128x128xf32, #tpu.memory_space<vmem>>, vector<128x128xf32>
    tpu.vector_store %arg8[%c0_26, %c0_27], %52 {strides = array<i32>} : memref<128x128xf32, #tpu.memory_space<vmem>>, vector<128x128xf32>,
    %c0_i32_28 = arith.constant 0 : i32
    %54 = arith.cmpi eq, %arg1, %c0_i32_28 : i32
    %55 = arith.extui %54 : i1 to i32
    %c0_i32_29 = arith.constant 0 : i32
    %56 = arith.cmpi ne, %55, %c0_i32_29 : i32
    scf.if %56 {
      %c0_30 = arith.constant 0 : index
      %c0_31 = arith.constant 0 : index
      %57 = vector.load %arg8[%c0_30, %c0_31] : memref<128x128xf32, #tpu.memory_space<vmem>>, vector<128x128xf32>
      %c0_32 = arith.constant 0 : index
      %c0_33 = arith.constant 0 : index
      %58 = vector.load %arg6[%c0_32, %c0_33] : memref<1x128xf32, #tpu.memory_space<vmem>>, vector<1x128xf32>
      %59 = vector.broadcast %58 : vector<1x128xf32> to vector<128x128xf32>
      %60 = arith.addf %57, %59 : vector<128x128xf32>
      %c0_34 = arith.constant 0 : index
      %c0_35 = arith.constant 0 : index
      %61 = vector.load %arg7[%c0_34, %c0_35] : memref<128x128xf32, #tpu.memory_space<vmem>>, vector<128x128xf32>
      tpu.vector_store %arg7[%c0_34, %c0_35], %60 {strides = array<i32>} : memref<128x128xf32, #tpu.memory_space<vmem>>, vector<128x128xf32>,
    } else {
    }
    return
  }
  func.func @transform_0(%arg0: i32, %arg1: i32) -> (i32, i32) {
    %c0_i32 = arith.constant 0 : i32
    %c0_i32_0 = arith.constant 0 : i32
    return %arg0, %c0_i32 : i32, i32
  }
  func.func @transform_1(%arg0: i32, %arg1: i32) -> (i32, i32) {
    %c0_i32 = arith.constant 0 : i32
    %c0_i32_0 = arith.constant 0 : i32
    return %c0_i32, %arg1 : i32, i32
  }
  func.func @transform_2(%arg0: i32, %arg1: i32) -> (i32, i32) {
    %c0_i32 = arith.constant 0 : i32
    %c0_i32_0 = arith.constant 0 : i32
    return %c0_i32, %arg1 : i32, i32
  }
  func.func @transform_3(%arg0: i32, %arg1: i32) -> (i32, i32) {
    %c0_i32 = arith.constant 0 : i32
    %c0_i32_0 = arith.constant 0 : i32
    return %arg1, %c0_i32 : i32, i32
  }
  func.func @transform_4(%arg0: i32, %arg1: i32) -> (i32, i32) {
    %c0_i32 = arith.constant 0 : i32
    %c0_i32_0 = arith.constant 0 : i32
    %c0_i32_1 = arith.constant 0 : i32
    return %c0_i32, %c0_i32_0 : i32, i32
  }
  func.func @transform_5(%arg0: i32, %arg1: i32) -> (i32, i32) {
    %c0_i32 = arith.constant 0 : i32
    %c0_i32_0 = arith.constant 0 : i32
    return %arg0, %c0_i32 : i32, i32
  }
}

</mosaic_0001>

<llo_original>
// kernel: tpu_custom_call.1
$region0: #{tpu_custom_call.1}
  #allocation0 [shape = 'u32[]', space=smem, size = 0x4, offset = 0x4, fixed_abs, tag = 'smem constant byte address 0x4 - core index']
  #allocation1 [shape = 'u32[144,128]{1,0:T(1,128)}', space=vmem, size = 0x12000, scoped, tag = 'internal scratch']
  #allocation2 [shape = 'f32[128,128]{1,0:T(8,128)}', space=vmem, size = 0x10000, scoped, tag = 'scratch operand']
  %s0 = inlined_call_operand.hbm [shape: f32[128,128], index: 0, kind: input, shape index: {}]
  %s1 = inlined_call_operand.hbm [shape: f32[128,128], index: 1, kind: input, shape index: {}]
  %s2 = inlined_call_operand.vmem [shape: f32[1,128], index: 2, kind: input, shape index: {}]
  %s3 = inlined_call_operand.hbm [shape: f32[128,128], index: 3, kind: input, shape index: {}]
  %s4 = inlined_call_operand.vmem [shape: f32[1,128], index: 4, kind: input, shape index: {}]
  %s5 = inlined_call_operand.hbm [shape: f32[128,128], index: 5, kind: output, shape index: {}]
  %s6 = sld [smem:[#allocation0]]
  $region50: #{tpu_custom_call.1} parent=0
    _
  %s8 = ssub.s32 1, %s6
  %s9 = scalar_select 0, %s8, %s6
  $region1: #{tpu_custom_call.1} parent=0
    #allocation3 [shape = 'u8[65536]{0}', space=vmem, size = 0x10000, scoped, tag = 'input window, operand 0, single buffered']
    #allocation4 [shape = 's32[1]{0}', space=sflag, size = 0x4, scoped, tag = 'scoped memory for tpu_custom_call.1']
    #allocation5 [shape = 's32[1]{0}', space=sflag, size = 0x4, scoped, tag = 'scoped memory for tpu_custom_call.1']
    #allocation6 [shape = 'u8[65536]{0}', space=vmem, size = 0x10000, scoped, tag = 'input window, operand 1, single buffered']
    #allocation7 [shape = 's32[1]{0}', space=sflag, size = 0x4, scoped, tag = 'scoped memory for tpu_custom_call.1']
    #allocation8 [shape = 'u8[65536]{0}', space=vmem, size = 0x10000, scoped, tag = 'input window, operand 3, single buffered']
    #allocation9 [shape = 'u8[65536]{0}', space=vmem, size = 0x10000, scoped, tag = 'output window, operand 0, single buffered']
    %10 = vsyncpa [#allocation4], 0
    %11 = vsyncpa [#allocation7], 0
    %12 = vsyncpa [#allocation5], 0
    // Predicated region
    $region2: #{tpu_custom_call.1} parent=1 // pred_check
      _
    $region3: #{tpu_custom_call.1} parent=1 // pred_check_branch
      %14 = sbr.rel (0) target = $region5
    $region4: #{tpu_custom_call.1} parent=1 // pred_region
      %s16 = ssub.s32 2048, 2048
      %17 = vsyncadd [#allocation4], %s16
      %s18 = sshll.u32 [#allocation3], 4
      %s19 = int_to_ptr.vmem [resolvable:$true] %s18
      %24 = dma.hbm_to_vmem [thread:$0]  %s0, 2048, %s19, [#allocation4], 128, 128, 8
    $region5: #{tpu_custom_call.1} parent=1 // pred_fallthru
      _
    // Predicated region
    $region6: #{tpu_custom_call.1} parent=1 // pred_check
      _
    $region7: #{tpu_custom_call.1} parent=1 // pred_check_branch
      %26 = sbr.rel (0) target = $region9
    $region8: #{tpu_custom_call.1} parent=1 // pred_region
      %s28 = ssub.s32 2048, 2048
      %29 = vsyncadd [#allocation7], %s28
      %s30 = sshll.u32 [#allocation6], 4
      %s31 = int_to_ptr.vmem [resolvable:$true] %s30
      %36 = dma.hbm_to_vmem [thread:$0]  %s1, 2048, %s31, [#allocation7], 128, 128, 8
    $region9: #{tpu_custom_call.1} parent=1 // pred_fallthru
      _
    // Predicated region
    $region10: #{tpu_custom_call.1} parent=1 // pred_check
      _
    $region11: #{tpu_custom_call.1} parent=1 // pred_check_branch
      %38 = sbr.rel (0) target = $region13
    $region12: #{tpu_custom_call.1} parent=1 // pred_region
      _
    $region13: #{tpu_custom_call.1} parent=1 // pred_fallthru
      _
    // Predicated region
    $region14: #{tpu_custom_call.1} parent=1 // pred_check
      _
    $region15: #{tpu_custom_call.1} parent=1 // pred_check_branch
      %40 = sbr.rel (0) target = $region17
    $region16: #{tpu_custom_call.1} parent=1 // pred_region
      %s42 = ssub.s32 2048, 2048
      %43 = vsyncadd [#allocation7], %s42
      %s44 = sshll.u32 [#allocation8], 4
      %s45 = int_to_ptr.vmem [resolvable:$true] %s44
      %50 = dma.hbm_to_vmem [thread:$0]  %s3, 2048, %s45, [#allocation7], 128, 128, 8
    $region17: #{tpu_custom_call.1} parent=1 // pred_fallthru
      _
    // Predicated region
    $region18: #{tpu_custom_call.1} parent=1 // pred_check
      _
    $region19: #{tpu_custom_call.1} parent=1 // pred_check_branch
      %52 = sbr.rel (0) target = $region21
    $region20: #{tpu_custom_call.1} parent=1 // pred_region
      _
    $region21: #{tpu_custom_call.1} parent=1 // pred_fallthru
      _
    // Predicated region
    $region22: #{tpu_custom_call.1} parent=1 // pred_check
      _
    $region23: #{tpu_custom_call.1} parent=1 // pred_check_branch
      %54 = sbr.rel (0) target = $region25
    $region24: #{tpu_custom_call.1} parent=1 // pred_region
      %55 = dma.done [#allocation4], 2048
    $region25: #{tpu_custom_call.1} parent=1 // pred_fallthru
      _
    // Predicated region
    $region26: #{tpu_custom_call.1} parent=1 // pred_check
      _
    $region27: #{tpu_custom_call.1} parent=1 // pred_check_branch
      %57 = sbr.rel (0) target = $region29
    $region28: #{tpu_custom_call.1} parent=1 // pred_region
      %58 = dma.done [#allocation7], 2048
    $region29: #{tpu_custom_call.1} parent=1 // pred_fallthru
      _
    // Predicated region
    $region30: #{tpu_custom_call.1} parent=1 // pred_check
      _
    $region31: #{tpu_custom_call.1} parent=1 // pred_check_branch
      %60 = sbr.rel (0) target = $region33
    $region32: #{tpu_custom_call.1} parent=1 // pred_region
      %61 = dma.done [#allocation7], 2048
    $region33: #{tpu_custom_call.1} parent=1 // pred_fallthru
      _
    %p62 = scmp.eq.s32.totalorder 0, 0
    // Predicated region
    $region34: #{tpu_custom_call.1} parent=1 // pred_check
      %p63 = pneg %p62
    $region35: #{tpu_custom_call.1} parent=1 // pred_check_branch
      %65 = sbr.rel (%p63) target = $region37
    $region36: #{tpu_custom_call.1} parent=1 // pred_region
      %66 = vst [vmem:[#allocation2] sm:$0xff] 0.0
      %67 = vst [vmem:[#allocation2 + $0x8] sm:$0xff] 0.0
      %68 = vst [vmem:[#allocation2 + $0x10] sm:$0xff] 0.0
      %69 = vst [vmem:[#allocation2 + $0x18] sm:$0xff] 0.0
      %70 = vst [vmem:[#allocation2 + $0x20] sm:$0xff] 0.0
      %71 = vst [vmem:[#allocation2 + $0x28] sm:$0xff] 0.0
      %72 = vst [vmem:[#allocation2 + $0x30] sm:$0xff] 0.0
      %73 = vst [vmem:[#allocation2 + $0x38] sm:$0xff] 0.0
      %74 = vst [vmem:[#allocation2 + $0x40] sm:$0xff] 0.0
      %75 = vst [vmem:[#allocation2 + $0x48] sm:$0xff] 0.0
      %76 = vst [vmem:[#allocation2 + $0x50] sm:$0xff] 0.0
      %77 = vst [vmem:[#allocation2 + $0x58] sm:$0xff] 0.0
      %78 = vst [vmem:[#allocation2 + $0x60] sm:$0xff] 0.0
      %79 = vst [vmem:[#allocation2 + $0x68] sm:$0xff] 0.0
      %80 = vst [vmem:[#allocation2 + $0x70] sm:$0xff] 0.0
      %81 = vst [vmem:[#allocation2 + $0x78] sm:$0xff] 0.0
    $region37: #{tpu_custom_call.1} parent=1 // pred_fallthru
      _
    %v82 = vld [vmem:[#allocation3] sm:$0xff]
    %v83 = vld [vmem:[#allocation3 + $0x8] sm:$0xff]
    %v84 = vld [vmem:[#allocation3 + $0x10] sm:$0xff]
    %v85 = vld [vmem:[#allocation3 + $0x18] sm:$0xff]
    %v86 = vld [vmem:[#allocation3 + $0x20] sm:$0xff]
    %v87 = vld [vmem:[#allocation3 + $0x28] sm:$0xff]
    %v88 = vld [vmem:[#allocation3 + $0x30] sm:$0xff]
    %v89 = vld [vmem:[#allocation3 + $0x38] sm:$0xff]
    %v90 = vld [vmem:[#allocation3 + $0x40] sm:$0xff]
    %v91 = vld [vmem:[#allocation3 + $0x48] sm:$0xff]
    %v92 = vld [vmem:[#allocation3 + $0x50] sm:$0xff]
    %v93 = vld [vmem:[#allocation3 + $0x58] sm:$0xff]
    %v94 = vld [vmem:[#allocation3 + $0x60] sm:$0xff]
    %v95 = vld [vmem:[#allocation3 + $0x68] sm:$0xff]
    %v96 = vld [vmem:[#allocation3 + $0x70] sm:$0xff]
    %v97 = vld [vmem:[#allocation3 + $0x78] sm:$0xff]
    %v98 = vld [vmem:[#allocation6] sm:$0xff]
    %v99 = vld [vmem:[#allocation6 + $0x8] sm:$0xff]
    %v100 = vld [vmem:[#allocation6 + $0x10] sm:$0xff]
    %v101 = vld [vmem:[#allocation6 + $0x18] sm:$0xff]
    %v102 = vld [vmem:[#allocation6 + $0x20] sm:$0xff]
    %v103 = vld [vmem:[#allocation6 + $0x28] sm:$0xff]
    %v104 = vld [vmem:[#allocation6 + $0x30] sm:$0xff]
    %v105 = vld [vmem:[#allocation6 + $0x38] sm:$0xff]
    %v106 = vld [vmem:[#allocation6 + $0x40] sm:$0xff]
    %v107 = vld [vmem:[#allocation6 + $0x48] sm:$0xff]
    %v108 = vld [vmem:[#allocation6 + $0x50] sm:$0xff]
    %v109 = vld [vmem:[#allocation6 + $0x58] sm:$0xff]
    %v110 = vld [vmem:[#allocation6 + $0x60] sm:$0xff]
    %v111 = vld [vmem:[#allocation6 + $0x68] sm:$0xff]
    %v112 = vld [vmem:[#allocation6 + $0x70] sm:$0xff]
    %v113 = vld [vmem:[#allocation6 + $0x78] sm:$0xff]
    %v114 = vld [vmem:[%s2] sm:$0x1]
    %v116 = vlaneseq
    %v117 = vshrl.u32 %v116, 7
    %v118 = vsub.s32 0, %v117
    %v119 = vrot.slane %v114, %v118
    %121 = vmatprep.subr.mxu0 0.0
    %122 = vmatpush1.msra.mxu0 %v98
    %123 = vmatprep.subr.mxu0 0.0
    %124 = vmatpush1.msra.mxu0 %v99
    %125 = vmatprep.subr.mxu0 0.0
    %126 = vmatpush1.msra.mxu0 %v100
    %127 = vmatprep.subr.mxu0 0.0
    %128 = vmatpush1.msra.mxu0 %v101
    %129 = vmatprep.subr.mxu0 0.0
    %130 = vmatpush1.msra.mxu0 %v102
    %131 = vmatprep.subr.mxu0 0.0
    %132 = vmatpush1.msra.mxu0 %v103
    %133 = vmatprep.subr.mxu0 0.0
    %134 = vmatpush1.msra.mxu0 %v104
    %135 = vmatprep.subr.mxu0 0.0
    %136 = vmatpush1.msra.mxu0 %v105
    %137 = vmatprep.subr.mxu0 0.0
    %138 = vmatpush1.msra.mxu0 %v106
    %139 = vmatprep.subr.mxu0 0.0
    %140 = vmatpush1.msra.mxu0 %v107
    %141 = vmatprep.subr.mxu0 0.0
    %142 = vmatpush1.msra.mxu0 %v108
    %143 = vmatprep.subr.mxu0 0.0
    %144 = vmatpush1.msra.mxu0 %v109
    %145 = vmatprep.subr.mxu0 0.0
    %146 = vmatpush1.msra.mxu0 %v110
    %147 = vmatprep.subr.mxu0 0.0
    %148 = vmatpush1.msra.mxu0 %v111
    %149 = vmatprep.subr.mxu0 0.0
    %150 = vmatpush1.msra.mxu0 %v112
    %151 = vmatprep.subr.mxu0 0.0
    %152 = vmatpush1.msra.mxu0 %v113
    %153 = vmatprep.subr.mxu0 0.0
    %154 = vmatpush1.msra.mxu0 0.0
    %155 = vmatprep.subr.mxu0 0.0
    %156 = vmatpush1.msra.mxu0 0.0
    %157 = vmatprep.subr.mxu0 0.0
    %158 = vmatpush1.msra.mxu0 0.0
    %159 = vmatprep.subr.mxu0 0.0
    %160 = vmatpush1.msra.mxu0 0.0
    %161 = vmatprep.subr.mxu0 0.0
    %162 = vmatpush1.msra.mxu0 0.0
    %163 = vmatprep.subr.mxu0 0.0
    %164 = vmatpush1.msra.mxu0 0.0
    %165 = vmatprep.subr.mxu0 0.0
    %166 = vmatpush1.msra.mxu0 0.0
    %167 = vmatprep.subr.mxu0 0.0
    %168 = vmatpush1.msra.mxu0 0.0
    %169 = vmatprep.subr.mxu0 0.0
    %170 = vmatpush1.msra.mxu0 0.0
    %171 = vmatprep.subr.mxu0 0.0
    %172 = vmatpush1.msra.mxu0 0.0
    %173 = vmatprep.subr.mxu0 0.0
    %174 = vmatpush1.msra.mxu0 0.0
    %175 = vmatprep.subr.mxu0 0.0
    %176 = vmatpush1.msra.mxu0 0.0
    %177 = vmatprep.subr.mxu0 0.0
    %178 = vmatpush1.msra.mxu0 0.0
    %179 = vmatprep.subr.mxu0 0.0
    %180 = vmatpush1.msra.mxu0 0.0
    %181 = vmatprep.subr.mxu0 0.0
    %182 = vmatpush1.msra.mxu0 0.0
    %183 = vmatprep.subr.mxu0 0.0
    %184 = vmatpush1.msra.mxu0 0.0
    %185 = vmatprep.mubr.f32.mxu0 0.0
    %186 = vmatmul.mubr.f32.gmra.mrb[0].mxu0 %v82
    %v187 = vpop.f32.mrb[0].mxu0
    %v188 = vadd.f32 %v119, %v187
    %v189 = vpop.f32.mrb[0].mxu0
    %190 = vmatprep.mubr.f32.mxu0 0.0
    %191 = vmatmul.mubr.f32.gmra.mrb[0].mxu0 %v83
    %v192 = vpop.f32.mrb[0].mxu0
    %v193 = vadd.f32 %v119, %v192
    %v194 = vpop.f32.mrb[0].mxu0
    %195 = vmatprep.mubr.f32.mxu0 0.0
    %196 = vmatmul.mubr.f32.gmra.mrb[0].mxu0 %v84
    %v197 = vpop.f32.mrb[0].mxu0
    %v198 = vadd.f32 %v119, %v197
    %v199 = vpop.f32.mrb[0].mxu0
    %200 = vmatprep.mubr.f32.mxu0 0.0
    %201 = vmatmul.mubr.f32.gmra.mrb[0].mxu0 %v85
    %v202 = vpop.f32.mrb[0].mxu0
    %v203 = vadd.f32 %v119, %v202
    %v204 = vpop.f32.mrb[0].mxu0
    %205 = vmatprep.mubr.f32.mxu0 0.0
    %206 = vmatmul.mubr.f32.gmra.mrb[0].mxu0 %v86
    %v207 = vpop.f32.mrb[0].mxu0
    %v208 = vadd.f32 %v119, %v207
    %v209 = vpop.f32.mrb[0].mxu0
    %210 = vmatprep.mubr.f32.mxu0 0.0
    %211 = vmatmul.mubr.f32.gmra.mrb[0].mxu0 %v87
    %v212 = vpop.f32.mrb[0].mxu0
    %v213 = vadd.f32 %v119, %v212
    %v214 = vpop.f32.mrb[0].mxu0
    %215 = vmatprep.mubr.f32.mxu0 0.0
    %216 = vmatmul.mubr.f32.gmra.mrb[0].mxu0 %v88
    %v217 = vpop.f32.mrb[0].mxu0
    %v218 = vadd.f32 %v119, %v217
    %v219 = vpop.f32.mrb[0].mxu0
    %220 = vmatprep.mubr.f32.mxu0 0.0
    %221 = vmatmul.mubr.f32.gmra.mrb[0].mxu0 %v89
    %v222 = vpop.f32.mrb[0].mxu0
    %v223 = vadd.f32 %v119, %v222
    %v224 = vpop.f32.mrb[0].mxu0
    %225 = vmatprep.mubr.f32.mxu0 0.0
    %226 = vmatmul.mubr.f32.gmra.mrb[0].mxu0 %v90
    %v227 = vpop.f32.mrb[0].mxu0
    %v228 = vadd.f32 %v119, %v227
    %v229 = vpop.f32.mrb[0].mxu0
    %230 = vmatprep.mubr.f32.mxu0 0.0
    %231 = vmatmul.mubr.f32.gmra.mrb[0].mxu0 %v91
    %v232 = vpop.f32.mrb[0].mxu0
    %v233 = vadd.f32 %v119, %v232
    %v234 = vpop.f32.mrb[0].mxu0
    %235 = vmatprep.mubr.f32.mxu0 0.0
    %236 = vmatmul.mubr.f32.gmra.mrb[0].mxu0 %v92
    %v237 = vpop.f32.mrb[0].mxu0
    %v238 = vadd.f32 %v119, %v237
    %v239 = vpop.f32.mrb[0].mxu0
    %240 = vmatprep.mubr.f32.mxu0 0.0
    %241 = vmatmul.mubr.f32.gmra.mrb[0].mxu0 %v93
    %v242 = vpop.f32.mrb[0].mxu0
    %v243 = vadd.f32 %v119, %v242
    %v244 = vpop.f32.mrb[0].mxu0
    %245 = vmatprep.mubr.f32.mxu0 0.0
    %246 = vmatmul.mubr.f32.gmra.mrb[0].mxu0 %v94
    %v247 = vpop.f32.mrb[0].mxu0
    %v248 = vadd.f32 %v119, %v247
    %v249 = vpop.f32.mrb[0].mxu0
    %250 = vmatprep.mubr.f32.mxu0 0.0
    %251 = vmatmul.mubr.f32.gmra.mrb[0].mxu0 %v95
    %v252 = vpop.f32.mrb[0].mxu0
    %v253 = vadd.f32 %v119, %v252
    %v254 = vpop.f32.mrb[0].mxu0
    %255 = vmatprep.mubr.f32.mxu0 0.0
    %256 = vmatmul.mubr.f32.gmra.mrb[0].mxu0 %v96
    %v257 = vpop.f32.mrb[0].mxu0
    %v258 = vadd.f32 %v119, %v257
    %v259 = vpop.f32.mrb[0].mxu0
    %260 = vmatprep.mubr.f32.mxu0 0.0
    %261 = vmatmul.mubr.f32.gmra.mrb[0].mxu0 %v97
    %v262 = vpop.f32.mrb[0].mxu0
    %v263 = vadd.f32 %v119, %v262
    %v264 = vpop.f32.mrb[0].mxu0
    %265 = vdwg.mxu0
    %v266 = vmul.f32 %v188, 0.5
    %v267 = vmul.f32 %v193, 0.5
    %v268 = vmul.f32 %v198, 0.5
    %v269 = vmul.f32 %v203, 0.5
    %v270 = vmul.f32 %v208, 0.5
    %v271 = vmul.f32 %v213, 0.5
    %v272 = vmul.f32 %v218, 0.5
    %v273 = vmul.f32 %v223, 0.5
    %v274 = vmul.f32 %v228, 0.5
    %v275 = vmul.f32 %v233, 0.5
    %v276 = vmul.f32 %v238, 0.5
    %v277 = vmul.f32 %v243, 0.5
    %v278 = vmul.f32 %v248, 0.5
    %v279 = vmul.f32 %v253, 0.5
    %v280 = vmul.f32 %v258, 0.5
    %v281 = vmul.f32 %v263, 0.5
    %v282 = vmul.f32 %v188, 0.70710677
    %v283 = vmul.f32 %v193, 0.70710677
    %v284 = vmul.f32 %v198, 0.70710677
    %v285 = vmul.f32 %v203, 0.70710677
    %v286 = vmul.f32 %v208, 0.70710677
    %v287 = vmul.f32 %v213, 0.70710677
    %v288 = vmul.f32 %v218, 0.70710677
    %v289 = vmul.f32 %v223, 0.70710677
    %v290 = vmul.f32 %v228, 0.70710677
    %v291 = vmul.f32 %v233, 0.70710677
    %v292 = vmul.f32 %v238, 0.70710677
    %v293 = vmul.f32 %v243, 0.70710677
    %v294 = vmul.f32 %v248, 0.70710677
    %v295 = vmul.f32 %v253, 0.70710677
    %v296 = vmul.f32 %v258, 0.70710677
    %v297 = vmul.f32 %v263, 0.70710677
    %v298 = vand.u32 2147483647, %v282
    %v299 = vand.u32 2147483647, %v283
    %v300 = vand.u32 2147483647, %v284
    %v301 = vand.u32 2147483647, %v285
    %v302 = vand.u32 2147483647, %v286
    %v303 = vand.u32 2147483647, %v287
    %v304 = vand.u32 2147483647, %v288
    %v305 = vand.u32 2147483647, %v289
    %v306 = vand.u32 2147483647, %v290
    %v307 = vand.u32 2147483647, %v291
    %v308 = vand.u32 2147483647, %v292
    %v309 = vand.u32 2147483647, %v293
    %v310 = vand.u32 2147483647, %v294
    %v311 = vand.u32 2147483647, %v295
    %v312 = vand.u32 2147483647, %v296
    %v313 = vand.u32 2147483647, %v297
    %v314 = vmul.f32 %v298, 0.3275911
    %v315 = vmul.f32 %v299, 0.3275911
    %v316 = vmul.f32 %v300, 0.3275911
    %v317 = vmul.f32 %v301, 0.3275911
    %v318 = vmul.f32 %v302, 0.3275911
    %v319 = vmul.f32 %v303, 0.3275911
    %v320 = vmul.f32 %v304, 0.3275911
    %v321 = vmul.f32 %v305, 0.3275911
    %v322 = vmul.f32 %v306, 0.3275911
    %v323 = vmul.f32 %v307, 0.3275911
    %v324 = vmul.f32 %v308, 0.3275911
    %v325 = vmul.f32 %v309, 0.3275911
    %v326 = vmul.f32 %v310, 0.3275911
    %v327 = vmul.f32 %v311, 0.3275911
    %v328 = vmul.f32 %v312, 0.3275911
    %v329 = vmul.f32 %v313, 0.3275911
    %v330 = vadd.f32 %v314, 1.0
    %v331 = vadd.f32 %v315, 1.0
    %v332 = vadd.f32 %v316, 1.0
    %v333 = vadd.f32 %v317, 1.0
    %v334 = vadd.f32 %v318, 1.0
    %v335 = vadd.f32 %v319, 1.0
    %v336 = vadd.f32 %v320, 1.0
    %v337 = vadd.f32 %v321, 1.0
    %v338 = vadd.f32 %v322, 1.0
    %v339 = vadd.f32 %v323, 1.0
    %v340 = vadd.f32 %v324, 1.0
    %v341 = vadd.f32 %v325, 1.0
    %v342 = vadd.f32 %v326, 1.0
    %v343 = vadd.f32 %v327, 1.0
    %v344 = vadd.f32 %v328, 1.0
    %v345 = vadd.f32 %v329, 1.0
    %v346 = vrcp.pop %v330
    %v347 = vmul.f32 1.0, %v346
    %v348 = vrcp.pop %v331
    %v349 = vmul.f32 1.0, %v348
    %v350 = vrcp.pop %v332
    %v351 = vmul.f32 1.0, %v350
    %v352 = vrcp.pop %v333
    %v353 = vmul.f32 1.0, %v352
    %v354 = vrcp.pop %v334
    %v355 = vmul.f32 1.0, %v354
    %v356 = vrcp.pop %v335
    %v357 = vmul.f32 1.0, %v356
    %v358 = vrcp.pop %v336
    %v359 = vmul.f32 1.0, %v358
    %v360 = vrcp.pop %v337
    %v361 = vmul.f32 1.0, %v360
    %v362 = vrcp.pop %v338
    %v363 = vmul.f32 1.0, %v362
    %v364 = vrcp.pop %v339
    %v365 = vmul.f32 1.0, %v364
    %v366 = vrcp.pop %v340
    %v367 = vmul.f32 1.0, %v366
    %v368 = vrcp.pop %v341
    %v369 = vmul.f32 1.0, %v368
    %v370 = vrcp.pop %v342
    %v371 = vmul.f32 1.0, %v370
    %v372 = vrcp.pop %v343
    %v373 = vmul.f32 1.0, %v372
    %v374 = vrcp.pop %v344
    %v375 = vmul.f32 1.0, %v374
    %v376 = vrcp.pop %v345
    %v377 = vmul.f32 1.0, %v376
    %v378 = vmul.f32 %v347, 1.0614054
    %v379 = vmul.f32 %v349, 1.0614054
    %v380 = vmul.f32 %v351, 1.0614054
    %v381 = vmul.f32 %v353, 1.0614054
    %v382 = vmul.f32 %v355, 1.0614054
    %v383 = vmul.f32 %v357, 1.0614054
    %v384 = vmul.f32 %v359, 1.0614054
    %v385 = vmul.f32 %v361, 1.0614054
    %v386 = vmul.f32 %v363, 1.0614054
    %v387 = vmul.f32 %v365, 1.0614054
    %v388 = vmul.f32 %v367, 1.0614054
    %v389 = vmul.f32 %v369, 1.0614054
    %v390 = vmul.f32 %v371, 1.0614054
    %v391 = vmul.f32 %v373, 1.0614054
    %v392 = vmul.f32 %v375, 1.0614054
    %v393 = vmul.f32 %v377, 1.0614054
    %v394 = vadd.f32 %v378, -1.4531521
    %v395 = vadd.f32 %v379, -1.4531521
    %v396 = vadd.f32 %v380, -1.4531521
    %v397 = vadd.f32 %v381, -1.4531521
    %v398 = vadd.f32 %v382, -1.4531521
    %v399 = vadd.f32 %v383, -1.4531521
    %v400 = vadd.f32 %v384, -1.4531521
    %v401 = vadd.f32 %v385, -1.4531521
    %v402 = vadd.f32 %v386, -1.4531521
    %v403 = vadd.f32 %v387, -1.4531521
    %v404 = vadd.f32 %v388, -1.4531521
    %v405 = vadd.f32 %v389, -1.4531521
    %v406 = vadd.f32 %v390, -1.4531521
    %v407 = vadd.f32 %v391, -1.4531521
    %v408 = vadd.f32 %v392, -1.4531521
    %v409 = vadd.f32 %v393, -1.4531521
    %v410 = vmul.f32 %v394, %v347
    %v411 = vmul.f32 %v395, %v349
    %v412 = vmul.f32 %v396, %v351
    %v413 = vmul.f32 %v397, %v353
    %v414 = vmul.f32 %v398, %v355
    %v415 = vmul.f32 %v399, %v357
    %v416 = vmul.f32 %v400, %v359
    %v417 = vmul.f32 %v401, %v361
    %v418 = vmul.f32 %v402, %v363
    %v419 = vmul.f32 %v403, %v365
    %v420 = vmul.f32 %v404, %v367
    %v421 = vmul.f32 %v405, %v369
    %v422 = vmul.f32 %v406, %v371
    %v423 = vmul.f32 %v407, %v373
    %v424 = vmul.f32 %v408, %v375
    %v425 = vmul.f32 %v409, %v377
    %v426 = vadd.f32 %v410, 1.4214138
    %v427 = vadd.f32 %v411, 1.4214138
    %v428 = vadd.f32 %v412, 1.4214138
    %v429 = vadd.f32 %v413, 1.4214138
    %v430 = vadd.f32 %v414, 1.4214138
    %v431 = vadd.f32 %v415, 1.4214138
    %v432 = vadd.f32 %v416, 1.4214138
    %v433 = vadd.f32 %v417, 1.4214138
    %v434 = vadd.f32 %v418, 1.4214138
    %v435 = vadd.f32 %v419, 1.4214138
    %v436 = vadd.f32 %v420, 1.4214138
    %v437 = vadd.f32 %v421, 1.4214138
    %v438 = vadd.f32 %v422, 1.4214138
    %v439 = vadd.f32 %v423, 1.4214138
    %v440 = vadd.f32 %v424, 1.4214138
    %v441 = vadd.f32 %v425, 1.4214138
    %v442 = vmul.f32 %v426, %v347
    %v443 = vmul.f32 %v427, %v349
    %v444 = vmul.f32 %v428, %v351
    %v445 = vmul.f32 %v429, %v353
    %v446 = vmul.f32 %v430, %v355
    %v447 = vmul.f32 %v431, %v357
    %v448 = vmul.f32 %v432, %v359
    %v449 = vmul.f32 %v433, %v361
    %v450 = vmul.f32 %v434, %v363
    %v451 = vmul.f32 %v435, %v365
    %v452 = vmul.f32 %v436, %v367
    %v453 = vmul.f32 %v437, %v369
    %v454 = vmul.f32 %v438, %v371
    %v455 = vmul.f32 %v439, %v373
    %v456 = vmul.f32 %v440, %v375
    %v457 = vmul.f32 %v441, %v377
    %v458 = vadd.f32 %v442, -0.28449672
    %v459 = vadd.f32 %v443, -0.28449672
    %v460 = vadd.f32 %v444, -0.28449672
    %v461 = vadd.f32 %v445, -0.28449672
    %v462 = vadd.f32 %v446, -0.28449672
    %v463 = vadd.f32 %v447, -0.28449672
    %v464 = vadd.f32 %v448, -0.28449672
    %v465 = vadd.f32 %v449, -0.28449672
    %v466 = vadd.f32 %v450, -0.28449672
    %v467 = vadd.f32 %v451, -0.28449672
    %v468 = vadd.f32 %v452, -0.28449672
    %v469 = vadd.f32 %v453, -0.28449672
    %v470 = vadd.f32 %v454, -0.28449672
    %v471 = vadd.f32 %v455, -0.28449672
    %v472 = vadd.f32 %v456, -0.28449672
    %v473 = vadd.f32 %v457, -0.28449672
    %v474 = vmul.f32 %v458, %v347
    %v475 = vmul.f32 %v459, %v349
    %v476 = vmul.f32 %v460, %v351
    %v477 = vmul.f32 %v461, %v353
    %v478 = vmul.f32 %v462, %v355
    %v479 = vmul.f32 %v463, %v357
    %v480 = vmul.f32 %v464, %v359
    %v481 = vmul.f32 %v465, %v361
    %v482 = vmul.f32 %v466, %v363
    %v483 = vmul.f32 %v467, %v365
    %v484 = vmul.f32 %v468, %v367
    %v485 = vmul.f32 %v469, %v369
    %v486 = vmul.f32 %v470, %v371
    %v487 = vmul.f32 %v471, %v373
    %v488 = vmul.f32 %v472, %v375
    %v489 = vmul.f32 %v473, %v377
    %v490 = vadd.f32 %v474, 0.2548296
    %v491 = vadd.f32 %v475, 0.2548296
    %v492 = vadd.f32 %v476, 0.2548296
    %v493 = vadd.f32 %v477, 0.2548296
    %v494 = vadd.f32 %v478, 0.2548296
    %v495 = vadd.f32 %v479, 0.2548296
    %v496 = vadd.f32 %v480, 0.2548296
    %v497 = vadd.f32 %v481, 0.2548296
    %v498 = vadd.f32 %v482, 0.2548296
    %v499 = vadd.f32 %v483, 0.2548296
    %v500 = vadd.f32 %v484, 0.2548296
    %v501 = vadd.f32 %v485, 0.2548296
    %v502 = vadd.f32 %v486, 0.2548296
    %v503 = vadd.f32 %v487, 0.2548296
    %v504 = vadd.f32 %v488, 0.2548296
    %v505 = vadd.f32 %v489, 0.2548296
    %v506 = vmul.f32 %v490, %v347
    %v507 = vmul.f32 %v491, %v349
    %v508 = vmul.f32 %v492, %v351
    %v509 = vmul.f32 %v493, %v353
    %v510 = vmul.f32 %v494, %v355
    %v511 = vmul.f32 %v495, %v357
    %v512 = vmul.f32 %v496, %v359
    %v513 = vmul.f32 %v497, %v361
    %v514 = vmul.f32 %v498, %v363
    %v515 = vmul.f32 %v499, %v365
    %v516 = vmul.f32 %v500, %v367
    %v517 = vmul.f32 %v501, %v369
    %v518 = vmul.f32 %v502, %v371
    %v519 = vmul.f32 %v503, %v373
    %v520 = vmul.f32 %v504, %v375
    %v521 = vmul.f32 %v505, %v377
    %v522 = vsub.f32 0.0, %v298
    %v523 = vsub.f32 0.0, %v299
    %v524 = vsub.f32 0.0, %v300
    %v525 = vsub.f32 0.0, %v301
    %v526 = vsub.f32 0.0, %v302
    %v527 = vsub.f32 0.0, %v303
    %v528 = vsub.f32 0.0, %v304
    %v529 = vsub.f32 0.0, %v305
    %v530 = vsub.f32 0.0, %v306
    %v531 = vsub.f32 0.0, %v307
    %v532 = vsub.f32 0.0, %v308
    %v533 = vsub.f32 0.0, %v309
    %v534 = vsub.f32 0.0, %v310
    %v535 = vsub.f32 0.0, %v311
    %v536 = vsub.f32 0.0, %v312
    %v537 = vsub.f32 0.0, %v313
    %v538 = vmul.f32 %v522, %v298
    %v539 = vmul.f32 %v523, %v299
    %v540 = vmul.f32 %v524, %v300
    %v541 = vmul.f32 %v525, %v301
    %v542 = vmul.f32 %v526, %v302
    %v543 = vmul.f32 %v527, %v303
    %v544 = vmul.f32 %v528, %v304
    %v545 = vmul.f32 %v529, %v305
    %v546 = vmul.f32 %v530, %v306
    %v547 = vmul.f32 %v531, %v307
    %v548 = vmul.f32 %v532, %v308
    %v549 = vmul.f32 %v533, %v309
    %v550 = vmul.f32 %v534, %v310
    %v551 = vmul.f32 %v535, %v311
    %v552 = vmul.f32 %v536, %v312
    %v553 = vmul.f32 %v537, %v313
    %v554 = vmul.f32 %v538, 1.442695
    %v555 = vpow.pop %v554
    %v556 = vmul.f32 %v539, 1.442695
    %v557 = vpow.pop %v556
    %v558 = vmul.f32 %v540, 1.442695
    %v559 = vpow.pop %v558
    %v560 = vmul.f32 %v541, 1.442695
    %v561 = vpow.pop %v560
    %v562 = vmul.f32 %v542, 1.442695
    %v563 = vpow.pop %v562
    %v564 = vmul.f32 %v543, 1.442695
    %v565 = vpow.pop %v564
    %v566 = vmul.f32 %v544, 1.442695
    %v567 = vpow.pop %v566
    %v568 = vmul.f32 %v545, 1.442695
    %v569 = vpow.pop %v568
    %v570 = vmul.f32 %v546, 1.442695
    %v571 = vpow.pop %v570
    %v572 = vmul.f32 %v547, 1.442695
    %v573 = vpow.pop %v572
    %v574 = vmul.f32 %v548, 1.442695
    %v575 = vpow.pop %v574
    %v576 = vmul.f32 %v549, 1.442695
    %v577 = vpow.pop %v576
    %v578 = vmul.f32 %v550, 1.442695
    %v579 = vpow.pop %v578
    %v580 = vmul.f32 %v551, 1.442695
    %v581 = vpow.pop %v580
    %v582 = vmul.f32 %v552, 1.442695
    %v583 = vpow.pop %v582
    %v584 = vmul.f32 %v553, 1.442695
    %v585 = vpow.pop %v584
    %v586 = vmul.f32 %v506, %v555
    %v587 = vmul.f32 %v507, %v557
    %v588 = vmul.f32 %v508, %v559
    %v589 = vmul.f32 %v509, %v561
    %v590 = vmul.f32 %v510, %v563
    %v591 = vmul.f32 %v511, %v565
    %v592 = vmul.f32 %v512, %v567
    %v593 = vmul.f32 %v513, %v569
    %v594 = vmul.f32 %v514, %v571
    %v595 = vmul.f32 %v515, %v573
    %v596 = vmul.f32 %v516, %v575
    %v597 = vmul.f32 %v517, %v577
    %v598 = vmul.f32 %v518, %v579
    %v599 = vmul.f32 %v519, %v581
    %v600 = vmul.f32 %v520, %v583
    %v601 = vmul.f32 %v521, %v585
    %v602 = vsub.f32 1.0, %v586
    %v603 = vsub.f32 1.0, %v587
    %v604 = vsub.f32 1.0, %v588
    %v605 = vsub.f32 1.0, %v589
    %v606 = vsub.f32 1.0, %v590
    %v607 = vsub.f32 1.0, %v591
    %v608 = vsub.f32 1.0, %v592
    %v609 = vsub.f32 1.0, %v593
    %v610 = vsub.f32 1.0, %v594
    %v611 = vsub.f32 1.0, %v595
    %v612 = vsub.f32 1.0, %v596
    %v613 = vsub.f32 1.0, %v597
    %v614 = vsub.f32 1.0, %v598
    %v615 = vsub.f32 1.0, %v599
    %v616 = vsub.f32 1.0, %v600
    %v617 = vsub.f32 1.0, %v601
    %vm618 = vcmp.lt.f32.partialorder %v282, 0.0
    %vm619 = vcmp.lt.f32.partialorder %v283, 0.0
    %vm620 = vcmp.lt.f32.partialorder %v284, 0.0
    %vm621 = vcmp.lt.f32.partialorder %v285, 0.0
    %vm622 = vcmp.lt.f32.partialorder %v286, 0.0
    %vm623 = vcmp.lt.f32.partialorder %v287, 0.0
    %vm624 = vcmp.lt.f32.partialorder %v288, 0.0
    %vm625 = vcmp.lt.f32.partialorder %v289, 0.0
    %vm626 = vcmp.lt.f32.partialorder %v290, 0.0
    %vm627 = vcmp.lt.f32.partialorder %v291, 0.0
    %vm628 = vcmp.lt.f32.partialorder %v292, 0.0
    %vm629 = vcmp.lt.f32.partialorder %v293, 0.0
    %vm630 = vcmp.lt.f32.partialorder %v294, 0.0
    %vm631 = vcmp.lt.f32.partialorder %v295, 0.0
    %vm632 = vcmp.lt.f32.partialorder %v296, 0.0
    %vm633 = vcmp.lt.f32.partialorder %v297, 0.0
    %v634 = vsub.f32 0.0, %v602
    %v635 = vsub.f32 0.0, %v603
    %v636 = vsub.f32 0.0, %v604
    %v637 = vsub.f32 0.0, %v605
    %v638 = vsub.f32 0.0, %v606
    %v639 = vsub.f32 0.0, %v607
    %v640 = vsub.f32 0.0, %v608
    %v641 = vsub.f32 0.0, %v609
    %v642 = vsub.f32 0.0, %v610
    %v643 = vsub.f32 0.0, %v611
    %v644 = vsub.f32 0.0, %v612
    %v645 = vsub.f32 0.0, %v613
    %v646 = vsub.f32 0.0, %v614
    %v647 = vsub.f32 0.0, %v615
    %v648 = vsub.f32 0.0, %v616
    %v649 = vsub.f32 0.0, %v617
    %v650 = vsel %vm618, %v634, %v602
    %v651 = vsel %vm619, %v635, %v603
    %v652 = vsel %vm620, %v636, %v604
    %v653 = vsel %vm621, %v637, %v605
    %v654 = vsel %vm622, %v638, %v606
    %v655 = vsel %vm623, %v639, %v607
    %v656 = vsel %vm624, %v640, %v608
    %v657 = vsel %vm625, %v641, %v609
    %v658 = vsel %vm626, %v642, %v610
    %v659 = vsel %vm627, %v643, %v611
    %v660 = vsel %vm628, %v644, %v612
    %v661 = vsel %vm629, %v645, %v613
    %v662 = vsel %vm630, %v646, %v614
    %v663 = vsel %vm631, %v647, %v615
    %v664 = vsel %vm632, %v648, %v616
    %v665 = vsel %vm633, %v649, %v617
    %v666 = vadd.f32 %v650, 1.0
    %v667 = vadd.f32 %v651, 1.0
    %v668 = vadd.f32 %v652, 1.0
    %v669 = vadd.f32 %v653, 1.0
    %v670 = vadd.f32 %v654, 1.0
    %v671 = vadd.f32 %v655, 1.0
    %v672 = vadd.f32 %v656, 1.0
    %v673 = vadd.f32 %v657, 1.0
    %v674 = vadd.f32 %v658, 1.0
    %v675 = vadd.f32 %v659, 1.0
    %v676 = vadd.f32 %v660, 1.0
    %v677 = vadd.f32 %v661, 1.0
    %v678 = vadd.f32 %v662, 1.0
    %v679 = vadd.f32 %v663, 1.0
    %v680 = vadd.f32 %v664, 1.0
    %v681 = vadd.f32 %v665, 1.0
    %v682 = vmul.f32 %v266, %v666
    %v683 = vmul.f32 %v267, %v667
    %v684 = vmul.f32 %v268, %v668
    %v685 = vmul.f32 %v269, %v669
    %v686 = vmul.f32 %v270, %v670
    %v687 = vmul.f32 %v271, %v671
    %v688 = vmul.f32 %v272, %v672
    %v689 = vmul.f32 %v273, %v673
    %v690 = vmul.f32 %v274, %v674
    %v691 = vmul.f32 %v275, %v675
    %v692 = vmul.f32 %v276, %v676
    %v693 = vmul.f32 %v277, %v677
    %v694 = vmul.f32 %v278, %v678
    %v695 = vmul.f32 %v279, %v679
    %v696 = vmul.f32 %v280, %v680
    %v697 = vmul.f32 %v281, %v681
    %v698 = vld [vmem:[#allocation2] sm:$0xff]
    %v699 = vld [vmem:[#allocation2 + $0x8] sm:$0xff]
    %v700 = vld [vmem:[#allocation2 + $0x10] sm:$0xff]
    %v701 = vld [vmem:[#allocation2 + $0x18] sm:$0xff]
    %v702 = vld [vmem:[#allocation2 + $0x20] sm:$0xff]
    %v703 = vld [vmem:[#allocation2 + $0x28] sm:$0xff]
    %v704 = vld [vmem:[#allocation2 + $0x30] sm:$0xff]
    %v705 = vld [vmem:[#allocation2 + $0x38] sm:$0xff]
    %v706 = vld [vmem:[#allocation2 + $0x40] sm:$0xff]
    %v707 = vld [vmem:[#allocation2 + $0x48] sm:$0xff]
    %v708 = vld [vmem:[#allocation2 + $0x50] sm:$0xff]
    %v709 = vld [vmem:[#allocation2 + $0x58] sm:$0xff]
    %v710 = vld [vmem:[#allocation2 + $0x60] sm:$0xff]
    %v711 = vld [vmem:[#allocation2 + $0x68] sm:$0xff]
    %v712 = vld [vmem:[#allocation2 + $0x70] sm:$0xff]
    %v713 = vld [vmem:[#allocation2 + $0x78] sm:$0xff]
    %v714 = vld [vmem:[#allocation8] sm:$0xff]
    %v715 = vld [vmem:[#allocation8 + $0x8] sm:$0xff]
    %v716 = vld [vmem:[#allocation8 + $0x10] sm:$0xff]
    %v717 = vld [vmem:[#allocation8 + $0x18] sm:$0xff]
    %v718 = vld [vmem:[#allocation8 + $0x20] sm:$0xff]
    %v719 = vld [vmem:[#allocation8 + $0x28] sm:$0xff]
    %v720 = vld [vmem:[#allocation8 + $0x30] sm:$0xff]
    %v721 = vld [vmem:[#allocation8 + $0x38] sm:$0xff]
    %v722 = vld [vmem:[#allocation8 + $0x40] sm:$0xff]
    %v723 = vld [vmem:[#allocation8 + $0x48] sm:$0xff]
    %v724 = vld [vmem:[#allocation8 + $0x50] sm:$0xff]
    %v725 = vld [vmem:[#allocation8 + $0x58] sm:$0xff]
    %v726 = vld [vmem:[#allocation8 + $0x60] sm:$0xff]
    %v727 = vld [vmem:[#allocation8 + $0x68] sm:$0xff]
    %v728 = vld [vmem:[#allocation8 + $0x70] sm:$0xff]
    %v729 = vld [vmem:[#allocation8 + $0x78] sm:$0xff]
    %730 = vmatprep.subr.mxu0 0.0
    %731 = vmatpush1.msra.mxu0 %v714
    %732 = vmatprep.subr.mxu0 0.0
    %733 = vmatpush1.msra.mxu0 %v715
    %734 = vmatprep.subr.mxu0 0.0
    %735 = vmatpush1.msra.mxu0 %v716
    %736 = vmatprep.subr.mxu0 0.0
    %737 = vmatpush1.msra.mxu0 %v717
    %738 = vmatprep.subr.mxu0 0.0
    %739 = vmatpush1.msra.mxu0 %v718
    %740 = vmatprep.subr.mxu0 0.0
    %741 = vmatpush1.msra.mxu0 %v719
    %742 = vmatprep.subr.mxu0 0.0
    %743 = vmatpush1.msra.mxu0 %v720
    %744 = vmatprep.subr.mxu0 0.0
    %745 = vmatpush1.msra.mxu0 %v721
    %746 = vmatprep.subr.mxu0 0.0
    %747 = vmatpush1.msra.mxu0 %v722
    %748 = vmatprep.subr.mxu0 0.0
    %749 = vmatpush1.msra.mxu0 %v723
    %750 = vmatprep.subr.mxu0 0.0
    %751 = vmatpush1.msra.mxu0 %v724
    %752 = vmatprep.subr.mxu0 0.0
    %753 = vmatpush1.msra.mxu0 %v725
    %754 = vmatprep.subr.mxu0 0.0
    %755 = vmatpush1.msra.mxu0 %v726
    %756 = vmatprep.subr.mxu0 0.0
    %757 = vmatpush1.msra.mxu0 %v727
    %758 = vmatprep.subr.mxu0 0.0
    %759 = vmatpush1.msra.mxu0 %v728
    %760 = vmatprep.subr.mxu0 0.0
    %761 = vmatpush1.msra.mxu0 %v729
    %762 = vmatprep.subr.mxu0 0.0
    %763 = vmatpush1.msra.mxu0 0.0
    %764 = vmatprep.subr.mxu0 0.0
    %765 = vmatpush1.msra.mxu0 0.0
    %766 = vmatprep.subr.mxu0 0.0
    %767 = vmatpush1.msra.mxu0 0.0
    %768 = vmatprep.subr.mxu0 0.0
    %769 = vmatpush1.msra.mxu0 0.0
    %770 = vmatprep.subr.mxu0 0.0
    %771 = vmatpush1.msra.mxu0 0.0
    %772 = vmatprep.subr.mxu0 0.0
    %773 = vmatpush1.msra.mxu0 0.0
    %774 = vmatprep.subr.mxu0 0.0
    %775 = vmatpush1.msra.mxu0 0.0
    %776 = vmatprep.subr.mxu0 0.0
    %777 = vmatpush1.msra.mxu0 0.0
    %778 = vmatprep.subr.mxu0 0.0
    %779 = vmatpush1.msra.mxu0 0.0
    %780 = vmatprep.subr.mxu0 0.0
    %781 = vmatpush1.msra.mxu0 0.0
    %782 = vmatprep.subr.mxu0 0.0
    %783 = vmatpush1.msra.mxu0 0.0
    %784 = vmatprep.subr.mxu0 0.0
    %785 = vmatpush1.msra.mxu0 0.0
    %786 = vmatprep.subr.mxu0 0.0
    %787 = vmatpush1.msra.mxu0 0.0
    %788 = vmatprep.subr.mxu0 0.0
    %789 = vmatpush1.msra.mxu0 0.0
    %790 = vmatprep.subr.mxu0 0.0
    %791 = vmatpush1.msra.mxu0 0.0
    %792 = vmatprep.subr.mxu0 0.0
    %793 = vmatpush1.msra.mxu0 0.0
    %794 = vmatprep.mubr.f32.mxu0 0.0
    %795 = vmatmul.mubr.f32.gmra.mrb[0].mxu0 %v682
    %v796 = vpop.f32.mrb[0].mxu0
    %v797 = vadd.f32 0.0, %v796
    %v798 = vpop.f32.mrb[0].mxu0
    %799 = vmatprep.mubr.f32.mxu0 0.0
    %800 = vmatmul.mubr.f32.gmra.mrb[0].mxu0 %v683
    %v801 = vpop.f32.mrb[0].mxu0
    %v802 = vadd.f32 0.0, %v801
    %v803 = vpop.f32.mrb[0].mxu0
    %804 = vmatprep.mubr.f32.mxu0 0.0
    %805 = vmatmul.mubr.f32.gmra.mrb[0].mxu0 %v684
    %v806 = vpop.f32.mrb[0].mxu0
    %v807 = vadd.f32 0.0, %v806
    %v808 = vpop.f32.mrb[0].mxu0
    %809 = vmatprep.mubr.f32.mxu0 0.0
    %810 = vmatmul.mubr.f32.gmra.mrb[0].mxu0 %v685
    %v811 = vpop.f32.mrb[0].mxu0
    %v812 = vadd.f32 0.0, %v811
    %v813 = vpop.f32.mrb[0].mxu0
    %814 = vmatprep.mubr.f32.mxu0 0.0
    %815 = vmatmul.mubr.f32.gmra.mrb[0].mxu0 %v686
    %v816 = vpop.f32.mrb[0].mxu0
    %v817 = vadd.f32 0.0, %v816
    %v818 = vpop.f32.mrb[0].mxu0
    %819 = vmatprep.mubr.f32.mxu0 0.0
    %820 = vmatmul.mubr.f32.gmra.mrb[0].mxu0 %v687
    %v821 = vpop.f32.mrb[0].mxu0
    %v822 = vadd.f32 0.0, %v821
    %v823 = vpop.f32.mrb[0].mxu0
    %824 = vmatprep.mubr.f32.mxu0 0.0
    %825 = vmatmul.mubr.f32.gmra.mrb[0].mxu0 %v688
    %v826 = vpop.f32.mrb[0].mxu0
    %v827 = vadd.f32 0.0, %v826
    %v828 = vpop.f32.mrb[0].mxu0
    %829 = vmatprep.mubr.f32.mxu0 0.0
    %830 = vmatmul.mubr.f32.gmra.mrb[0].mxu0 %v689
    %v831 = vpop.f32.mrb[0].mxu0
    %v832 = vadd.f32 0.0, %v831
    %v833 = vpop.f32.mrb[0].mxu0
    %834 = vmatprep.mubr.f32.mxu0 0.0
    %835 = vmatmul.mubr.f32.gmra.mrb[0].mxu0 %v690
    %v836 = vpop.f32.mrb[0].mxu0
    %v837 = vadd.f32 0.0, %v836
    %v838 = vpop.f32.mrb[0].mxu0
    %839 = vmatprep.mubr.f32.mxu0 0.0
    %840 = vmatmul.mubr.f32.gmra.mrb[0].mxu0 %v691
    %v841 = vpop.f32.mrb[0].mxu0
    %v842 = vadd.f32 0.0, %v841
    %v843 = vpop.f32.mrb[0].mxu0
    %844 = vmatprep.mubr.f32.mxu0 0.0
    %845 = vmatmul.mubr.f32.gmra.mrb[0].mxu0 %v692
    %v846 = vpop.f32.mrb[0].mxu0
    %v847 = vadd.f32 0.0, %v846
    %v848 = vpop.f32.mrb[0].mxu0
    %849 = vmatprep.mubr.f32.mxu0 0.0
    %850 = vmatmul.mubr.f32.gmra.mrb[0].mxu0 %v693
    %v851 = vpop.f32.mrb[0].mxu0
    %v852 = vadd.f32 0.0, %v851
    %v853 = vpop.f32.mrb[0].mxu0
    %854 = vmatprep.mubr.f32.mxu0 0.0
    %855 = vmatmul.mubr.f32.gmra.mrb[0].mxu0 %v694
    %v856 = vpop.f32.mrb[0].mxu0
    %v857 = vadd.f32 0.0, %v856
    %v858 = vpop.f32.mrb[0].mxu0
    %859 = vmatprep.mubr.f32.mxu0 0.0
    %860 = vmatmul.mubr.f32.gmra.mrb[0].mxu0 %v695
    %v861 = vpop.f32.mrb[0].mxu0
    %v862 = vadd.f32 0.0, %v861
    %v863 = vpop.f32.mrb[0].mxu0
    %864 = vmatprep.mubr.f32.mxu0 0.0
    %865 = vmatmul.mubr.f32.gmra.mrb[0].mxu0 %v696
    %v866 = vpop.f32.mrb[0].mxu0
    %v867 = vadd.f32 0.0, %v866
    %v868 = vpop.f32.mrb[0].mxu0
    %869 = vmatprep.mubr.f32.mxu0 0.0
    %870 = vmatmul.mubr.f32.gmra.mrb[0].mxu0 %v697
    %v871 = vpop.f32.mrb[0].mxu0
    %v872 = vadd.f32 0.0, %v871
    %v873 = vpop.f32.mrb[0].mxu0
    %874 = vdwg.mxu0
    %v875 = vadd.f32 %v698, %v797
    %v876 = vadd.f32 %v699, %v802
    %v877 = vadd.f32 %v700, %v807
    %v878 = vadd.f32 %v701, %v812
    %v879 = vadd.f32 %v702, %v817
    %v880 = vadd.f32 %v703, %v822
    %v881 = vadd.f32 %v704, %v827
    %v882 = vadd.f32 %v705, %v832
    %v883 = vadd.f32 %v706, %v837
    %v884 = vadd.f32 %v707, %v842
    %v885 = vadd.f32 %v708, %v847
    %v886 = vadd.f32 %v709, %v852
    %v887 = vadd.f32 %v710, %v857
    %v888 = vadd.f32 %v711, %v862
    %v889 = vadd.f32 %v712, %v867
    %v890 = vadd.f32 %v713, %v872
    %891 = vst [vmem:[#allocation2] sm:$0xff] %v875
    %892 = vst [vmem:[#allocation2 + $0x8] sm:$0xff] %v876
    %893 = vst [vmem:[#allocation2 + $0x10] sm:$0xff] %v877
    %894 = vst [vmem:[#allocation2 + $0x18] sm:$0xff] %v878
    %895 = vst [vmem:[#allocation2 + $0x20] sm:$0xff] %v879
    %896 = vst [vmem:[#allocation2 + $0x28] sm:$0xff] %v880
    %897 = vst [vmem:[#allocation2 + $0x30] sm:$0xff] %v881
    %898 = vst [vmem:[#allocation2 + $0x38] sm:$0xff] %v882
    %899 = vst [vmem:[#allocation2 + $0x40] sm:$0xff] %v883
    %900 = vst [vmem:[#allocation2 + $0x48] sm:$0xff] %v884
    %901 = vst [vmem:[#allocation2 + $0x50] sm:$0xff] %v885
    %902 = vst [vmem:[#allocation2 + $0x58] sm:$0xff] %v886
    %903 = vst [vmem:[#allocation2 + $0x60] sm:$0xff] %v887
    %904 = vst [vmem:[#allocation2 + $0x68] sm:$0xff] %v888
    %905 = vst [vmem:[#allocation2 + $0x70] sm:$0xff] %v889
    %906 = vst [vmem:[#allocation2 + $0x78] sm:$0xff] %v890
    // Predicated region
    $region38: #{tpu_custom_call.1} parent=1 // pred_check
      %p907 = pneg %p62
    $region39: #{tpu_custom_call.1} parent=1 // pred_check_branch
      %909 = sbr.rel (%p907) target = $region41
    $region40: #{tpu_custom_call.1} parent=1 // pred_region
      %v910 = vld [vmem:[#allocation2] sm:$0xff]
      %v911 = vld [vmem:[#allocation2 + $0x8] sm:$0xff]
      %v912 = vld [vmem:[#allocation2 + $0x10] sm:$0xff]
      %v913 = vld [vmem:[#allocation2 + $0x18] sm:$0xff]
      %v914 = vld [vmem:[#allocation2 + $0x20] sm:$0xff]
      %v915 = vld [vmem:[#allocation2 + $0x28] sm:$0xff]
      %v916 = vld [vmem:[#allocation2 + $0x30] sm:$0xff]
      %v917 = vld [vmem:[#allocation2 + $0x38] sm:$0xff]
      %v918 = vld [vmem:[#allocation2 + $0x40] sm:$0xff]
      %v919 = vld [vmem:[#allocation2 + $0x48] sm:$0xff]
      %v920 = vld [vmem:[#allocation2 + $0x50] sm:$0xff]
      %v921 = vld [vmem:[#allocation2 + $0x58] sm:$0xff]
      %v922 = vld [vmem:[#allocation2 + $0x60] sm:$0xff]
      %v923 = vld [vmem:[#allocation2 + $0x68] sm:$0xff]
      %v924 = vld [vmem:[#allocation2 + $0x70] sm:$0xff]
      %v925 = vld [vmem:[#allocation2 + $0x78] sm:$0xff]
      %v926 = vld [vmem:[%s4] sm:$0x1]
      %v928 = vlaneseq
      %v929 = vshrl.u32 %v928, 7
      %v930 = vsub.s32 0, %v929
      %v931 = vrot.slane %v926, %v930
      %v933 = vadd.f32 %v910, %v931
      %v934 = vadd.f32 %v911, %v931
      %v935 = vadd.f32 %v912, %v931
      %v936 = vadd.f32 %v913, %v931
      %v937 = vadd.f32 %v914, %v931
      %v938 = vadd.f32 %v915, %v931
      %v939 = vadd.f32 %v916, %v931
      %v940 = vadd.f32 %v917, %v931
      %v941 = vadd.f32 %v918, %v931
      %v942 = vadd.f32 %v919, %v931
      %v943 = vadd.f32 %v920, %v931
      %v944 = vadd.f32 %v921, %v931
      %v945 = vadd.f32 %v922, %v931
      %v946 = vadd.f32 %v923, %v931
      %v947 = vadd.f32 %v924, %v931
      %v948 = vadd.f32 %v925, %v931
      %949 = vst [vmem:[#allocation9] sm:$0xff] %v933
      %950 = vst [vmem:[#allocation9 + $0x8] sm:$0xff] %v934
      %951 = vst [vmem:[#allocation9 + $0x10] sm:$0xff] %v935
      %952 = vst [vmem:[#allocation9 + $0x18] sm:$0xff] %v936
      %953 = vst [vmem:[#allocation9 + $0x20] sm:$0xff] %v937
      %954 = vst [vmem:[#allocation9 + $0x28] sm:$0xff] %v938
      %955 = vst [vmem:[#allocation9 + $0x30] sm:$0xff] %v939
      %956 = vst [vmem:[#allocation9 + $0x38] sm:$0xff] %v940
      %957 = vst [vmem:[#allocation9 + $0x40] sm:$0xff] %v941
      %958 = vst [vmem:[#allocation9 + $0x48] sm:$0xff] %v942
      %959 = vst [vmem:[#allocation9 + $0x50] sm:$0xff] %v943
      %960 = vst [vmem:[#allocation9 + $0x58] sm:$0xff] %v944
      %961 = vst [vmem:[#allocation9 + $0x60] sm:$0xff] %v945
      %962 = vst [vmem:[#allocation9 + $0x68] sm:$0xff] %v946
      %963 = vst [vmem:[#allocation9 + $0x70] sm:$0xff] %v947
      %964 = vst [vmem:[#allocation9 + $0x78] sm:$0xff] %v948
    $region41: #{tpu_custom_call.1} parent=1 // pred_fallthru
      _
    // Predicated region
    $region42: #{tpu_custom_call.1} parent=1 // pred_check
      _
    $region43: #{tpu_custom_call.1} parent=1 // pred_check_branch
      %966 = sbr.rel (0) target = $region45
    $region44: #{tpu_custom_call.1} parent=1 // pred_region
      %s968 = ssub.s32 2048, 2048
      %969 = vsyncadd [#allocation5], %s968
      %s970 = sshll.u32 [#allocation9], 4
      %s971 = int_to_ptr.vmem [resolvable:$true] %s970
      %976 = dma.vmem_to_hbm [thread:$0]  %s971, 2048, %s5, [#allocation5], 128, 128, 8
    $region45: #{tpu_custom_call.1} parent=1 // pred_fallthru
      _
    // Predicated region
    $region46: #{tpu_custom_call.1} parent=1 // pred_check
      _
    $region47: #{tpu_custom_call.1} parent=1 // pred_check_branch
      %978 = sbr.rel (0) target = $region49
    $region48: #{tpu_custom_call.1} parent=1 // pred_region
      %979 = dma.done [#allocation5], 2048
    $region49: #{tpu_custom_call.1} parent=1 // pred_fallthru
      _
    %980 = vsyncpa [#allocation4], 1
    %981 = vsyncpa [#allocation7], 1
    %982 = vsyncpa [#allocation5], 1

</llo_original>
